<compile_context>
chip_gen: v7x
topology: tpu7x:2x2x1
jax: 0.10.0
libtpu: 0.0.40
codegen_flags: <defaults>
</compile_context>

<pallas_src>
import math
import functools

import jax
import jax.numpy as jnp
from jax import lax
from jax.experimental import pallas as pl
from jax.experimental.pallas import tpu as pltpu


def _conv_block_kernel(x_ref, w_ref, shift_ref, pool_ref, out_ref, act_ref, *,
                       NB, H, KH, WCIN):
    """One grid step: NB images fused conv + BN + ReLU + 2x2 avg-pool.

    x_ref:     (NB, H+4, WCIN)   bf16  zero-padded input, lanes ordered (w, cin)
    w_ref:     (KH, WCIN, NOUTP) bf16  banded conv weights (BN scale folded)
    shift_ref: (1, NOUTP)        f32   folded BN shift, tiled over w
    pool_ref:  (NOUTP, NPOOLP)   f32   sparse 2x-in-W pooling / 0.25-scale matrix
    out_ref:   (NB*Hp, NPOOLP)   f32   pooled rows (n, oh), lanes ordered (ow, cout)
    act_ref:   (NB*H, NOUTP)     f32   scratch: post-BN/ReLU activations
    """
    Hp = H // 2
    M = NB * H

    # ---- 5x5 conv: KH accumulated MXU matmuls.  The (kw, cin) taps of each kernel
    # row are folded into the contraction dim by the banded weight matrix, so the
    # LHS is just a shifted slice of the padded input -- no im2col, no per-tap
    # relayout, no in-kernel casts (operands arrive in bf16). ----
    acc = None
    for kh in range(KH):
        lhs = x_ref[:, kh:kh + H, :].reshape(M, WCIN)          # (M, WCIN) bf16
        part = jnp.dot(lhs, w_ref[kh], preferred_element_type=jnp.float32)
        acc = part if acc is None else acc + part

    # ---- folded BatchNorm (scale already inside weights) + ReLU, f32 epilogue ----
    act_ref[...] = jnp.maximum(acc + shift_ref[...], 0.0)

    # ---- 2x2 average pool ----
    # H direction: rows are ordered (n, h) with H even, so row parity == h parity;
    # two stride-2 sublane reads pair every (2*oh, 2*oh+1) image row.
    hp = (act_ref[pl.ds(0, NB * Hp, stride=2), :] +
          act_ref[pl.ds(1, NB * Hp, stride=2), :])
    # W direction + 0.25 scale + lane repack (w, cout) -> (ow, cout): one tiny f32
    # matmul against a sparse pooling matrix (the MXU has plenty of slack here) and
    # the final store stays 128-lane dense.
    out_ref[...] = jnp.dot(hp, pool_ref[...], preferred_element_type=jnp.float32)


def _round_up(x, m):
    return (x + m - 1) // m * m


def _pick_batch_tile(N, Hp):
    """Smallest divisor of N whose output block stays sublane-aligned.

    Favours more grid steps (megacore sharding); falls back to the whole batch."""
    for d in range(1, N + 1):
        if N % d == 0 and (d * Hp) % 8 == 0:
            return d
    return N


# TODO(synk): only the default pool_type='avg' path of ConvBlock5x5.forward is fused
# (the 'max' / 'avg+max' variants would replace the pooling adds with jnp.maximum).
def conv_block5x5_forward(x_nchw, weight, gamma, beta, running_mean, running_var,
                          eps=1e-5, compute_dtype=jnp.bfloat16):
    """x_nchw: (N, Cin, H, W) f32.  weight: (Cout, Cin, 5, 5).  Returns (N, Cout, H/2, W/2)."""
    N, Cin, H, W = x_nchw.shape
    Cout, _, KH, KW = weight.shape
    assert H % 2 == 0 and W % 2 == 0, "2x2 avg-pool expects even spatial dims"
    pad_h, pad_w = KH // 2, KW // 2
    Hp, Wp = H // 2, W // 2
    Wpad = W + 2 * pad_w
    WCIN = Wpad * Cin                # conv contraction width (LHS lanes)
    NOUT = W * Cout                  # conv output lanes, ordered (w, cout)
    NOUTP = _round_up(NOUT, 128)     # keep MXU N-dim / stores lane-dense
    NPOOL = Wp * Cout                # pooled output lanes, ordered (ow, cout)
    NPOOLP = _round_up(NPOOL, 128)
    # TODO(synk): the banded weight / pooling matrices scale with W*Cout; very large
    # feature maps would additionally need W tiling (not needed at these shapes).

    # --- layout glue: NCHW -> zero-padded (N, H+4, (W+4)*Cin) bf16; NO im2col in HBM ---
    x_nhwc = jnp.transpose(x_nchw, (0, 2, 3, 1))
    x_pad = jnp.pad(x_nhwc, ((0, 0), (pad_h, pad_h), (pad_w, pad_w), (0, 0)))
    x2 = x_pad.reshape(N, H + 2 * pad_h, WCIN).astype(compute_dtype)

    # --- fold BatchNorm (eval / running stats) into the weights, build banded matrix ---
    inv_std = gamma / jnp.sqrt(running_var + eps)
    w_scaled = jnp.transpose(weight, (2, 3, 1, 0)) * inv_std          # (KH, KW, Cin, Cout)
    w_flat = w_scaled.reshape(KH, KW * Cin, Cout).astype(jnp.float32)
    # wT[kh, (w+kw)*Cin+ci, w*Cout+co] = weight[co, ci, kh, kw] * inv_std[co]
    wT = jnp.zeros((KH, WCIN, NOUTP), jnp.float32)
    for w in range(W):
        wT = wT.at[:, w * Cin:w * Cin + KW * Cin, w * Cout:(w + 1) * Cout].set(w_flat)
    wT = wT.astype(compute_dtype)                                      # bf16 MXU operand

    shift = beta - running_mean * inv_std                              # per-channel shift
    shift2 = jnp.zeros((1, NOUTP), jnp.float32).at[0, :NOUT].set(jnp.tile(shift, W))

    # sparse pooling matrix: sums the two w's of each output column, scales by 0.25,
    # and repacks lanes from (w, cout) to (ow, cout).
    eye = 0.25 * jnp.eye(Cout, dtype=jnp.float32)
    pool = jnp.zeros((NOUTP, NPOOLP), jnp.float32)
    for w in range(W):
        ow = w // 2
        pool = pool.at[w * Cout:(w + 1) * Cout, ow * Cout:(ow + 1) * Cout].set(eye)

    nb = _pick_batch_tile(N, Hp)
    grid = (N // nb,)

    kernel = functools.partial(_conv_block_kernel, NB=nb, H=H, KH=KH, WCIN=WCIN)

    out2 = pl.pallas_call(
        kernel,
        out_shape=jax.ShapeDtypeStruct((N * Hp, NPOOLP), jnp.float32),
        grid_spec=pltpu.PrefetchScalarGridSpec(
            num_scalar_prefetch=0,
            grid=grid,
            in_specs=[
                pl.BlockSpec((nb, H + 2 * pad_h, WCIN), lambda b: (b, 0, 0)),
                pl.BlockSpec((KH, WCIN, NOUTP), lambda b: (0, 0, 0)),
                pl.BlockSpec((1, NOUTP), lambda b: (0, 0)),
                pl.BlockSpec((NOUTP, NPOOLP), lambda b: (0, 0)),
            ],
            out_specs=pl.BlockSpec((nb * Hp, NPOOLP), lambda b: (b, 0)),
            scratch_shapes=[
                pltpu.VMEM((nb * H, NOUTP), jnp.float32),   # post-BN/ReLU activations
            ],
        ),
        compiler_params=pltpu.CompilerParams(
            dimension_semantics=("parallel",),
            vmem_limit_bytes=64 * 1024 * 1024,
        ),
    )(x2, wT, shift2, pool)

    # rows are (n, oh); lanes (ow, cout).  Drop lane padding, go back to NCHW.
    out = out2[:, :NPOOL].reshape(N, Hp, Wp, Cout)
    return jnp.transpose(out, (0, 3, 1, 2))


def _reference(x_nchw, weight, gamma, beta, running_mean, running_var, eps=1e-5):
    """Pure-JAX f32 reference for correctness check."""
    conv = lax.conv_general_dilated(
        x_nchw, weight, window_strides=(1, 1), padding=((2, 2), (2, 2)),
        dimension_numbers=("NCHW", "OIHW", "NCHW"))
    s = gamma / jnp.sqrt(running_var + eps)
    x = conv * s[None, :, None, None] + (beta - running_mean * s)[None, :, None, None]
    x = jnp.maximum(x, 0.0)
    N, C, H, W = x.shape
    return x.reshape(N, C, H // 2, 2, W // 2, 2).mean(axis=(3, 5))


if __name__ == "__main__":
    key = jax.random.PRNGKey(0)
    N, Cin, H, W = 2, 4, 16, 16
    Cout, KH, KW = 8, 5, 5

    k_x, k_w = jax.random.split(key)
    x = jax.random.normal(k_x, (N, Cin, H, W), jnp.float32)

    # deterministic Xavier-uniform init for the conv weight (bias=False)
    fan_in, fan_out = Cin * KH * KW, Cout * KH * KW
    bound = math.sqrt(6.0 / (fan_in + fan_out))
    weight = jax.random.uniform(k_w, (Cout, Cin, KH, KW), jnp.float32, -bound, bound)

    # BatchNorm params as initialized by init_bn (weight=1, bias=0) + default running stats
    gamma = jnp.ones((Cout,), jnp.float32)
    beta = jnp.zeros((Cout,), jnp.float32)
    running_mean = jnp.zeros((Cout,), jnp.float32)
    running_var = jnp.ones((Cout,), jnp.float32)

    fwd = jax.jit(conv_block5x5_forward)
    out = jax.block_until_ready(fwd(x, weight, gamma, beta, running_mean, running_var))

    ref = _reference(x, weight, gamma, beta, running_mean, running_var)
    assert out.shape == (N, Cout, H // 2, W // 2), out.shape
    # bf16 MXU operands (f32 accumulation) -> compare against the f32 reference with a
    # correspondingly wider tolerance.
    assert jnp.allclose(out, ref, atol=5e-2, rtol=5e-2), float(jnp.max(jnp.abs(out - ref)))
    print("KERNEL_OK")
</pallas_src>

<mosaic_0001>
module attributes {stable_mosaic.version = 11 : i64} {
  func.func @_conv_block_kernel(%arg0: i32, %arg1: memref<1x20x80xbf16, #tpu.memory_space<vmem>>, %arg2: memref<5x80x128xbf16, #tpu.memory_space<vmem>>, %arg3: memref<1x128xf32, #tpu.memory_space<vmem>>, %arg4: memref<128x128xf32, #tpu.memory_space<vmem>>, %arg5: memref<8x128xf32, #tpu.memory_space<vmem>>, %arg6: memref<16x128xf32, #tpu.memory_space<vmem>>) attributes {dimension_semantics = [#tpu.dimension_semantics<parallel>], iteration_bounds = array<i64: 2>, scalar_prefetch = 0 : i64, scratch_operands = 1 : i64, tpu.core_type = #tpu.core_type<tc>, window_params = [{transform_indices = @transform_0, window_bounds = array<i64: 1, 20, 80>}, {pipeline_mode = #tpu.pipeline_mode<synchronous>, transform_indices = @transform_1, window_bounds = array<i64: 5, 80, 128>}, {pipeline_mode = #tpu.pipeline_mode<synchronous>, transform_indices = @transform_2, window_bounds = array<i64: 1, 128>}, {pipeline_mode = #tpu.pipeline_mode<synchronous>, transform_indices = @transform_3, window_bounds = array<i64: 128, 128>}, {transform_indices = @transform_4, window_bounds = array<i64: 8, 128>}]} {
    %c0 = arith.constant 0 : index
    %c0_0 = arith.constant 0 : index
    %c0_1 = arith.constant 0 : index
    %0 = vector.load %arg1[%c0, %c0_0, %c0_1] : memref<1x20x80xbf16, #tpu.memory_space<vmem>>, vector<1x16x80xbf16>
    %1 = vector.shape_cast %0 : vector<1x16x80xbf16> to vector<16x80xbf16>
    %c0_2 = arith.constant 0 : index
    %c0_3 = arith.constant 0 : index
    %c0_4 = arith.constant 0 : index
    %2 = vector.load %arg2[%c0_2, %c0_3, %c0_4] : memref<5x80x128xbf16, #tpu.memory_space<vmem>>, vector<1x80x128xbf16>
    %3 = vector.shape_cast %2 : vector<1x80x128xbf16> to vector<80x128xbf16>
    %cst = arith.constant dense<0.000000e+00> : vector<16x128xf32>
    %4 = tpu.matmul %1, %3, %cst {dimension_numbers = #tpu.dot_dimension_numbers<[1], [0], [0], [1], [0, 0, 1, 1], [], []>} : vector<16x80xbf16>, vector<80x128xbf16>, vector<16x128xf32> -> vector<16x128xf32>
    %c0_5 = arith.constant 0 : index
    %c1 = arith.constant 1 : index
    %c0_6 = arith.constant 0 : index
    %5 = vector.load %arg1[%c0_5, %c1, %c0_6] : memref<1x20x80xbf16, #tpu.memory_space<vmem>>, vector<1x16x80xbf16>
    %6 = vector.shape_cast %5 : vector<1x16x80xbf16> to vector<16x80xbf16>
    %c1_7 = arith.constant 1 : index
    %c0_8 = arith.constant 0 : index
    %c0_9 = arith.constant 0 : index
    %7 = vector.load %arg2[%c1_7, %c0_8, %c0_9] : memref<5x80x128xbf16, #tpu.memory_space<vmem>>, vector<1x80x128xbf16>
    %8 = vector.shape_cast %7 : vector<1x80x128xbf16> to vector<80x128xbf16>
    %cst_10 = arith.constant dense<0.000000e+00> : vector<16x128xf32>
    %9 = tpu.matmul %6, %8, %cst_10 {dimension_numbers = #tpu.dot_dimension_numbers<[1], [0], [0], [1], [0, 0, 1, 1], [], []>} : vector<16x80xbf16>, vector<80x128xbf16>, vector<16x128xf32> -> vector<16x128xf32>
    %10 = arith.addf %4, %9 : vector<16x128xf32>
    %c0_11 = arith.constant 0 : index
    %c2 = arith.constant 2 : index
    %c0_12 = arith.constant 0 : index
    %11 = vector.load %arg1[%c0_11, %c2, %c0_12] : memref<1x20x80xbf16, #tpu.memory_space<vmem>>, vector<1x16x80xbf16>
    %12 = vector.shape_cast %11 : vector<1x16x80xbf16> to vector<16x80xbf16>
    %c2_13 = arith.constant 2 : index
    %c0_14 = arith.constant 0 : index
    %c0_15 = arith.constant 0 : index
    %13 = vector.load %arg2[%c2_13, %c0_14, %c0_15] : memref<5x80x128xbf16, #tpu.memory_space<vmem>>, vector<1x80x128xbf16>
    %14 = vector.shape_cast %13 : vector<1x80x128xbf16> to vector<80x128xbf16>
    %cst_16 = arith.constant dense<0.000000e+00> : vector<16x128xf32>
    %15 = tpu.matmul %12, %14, %cst_16 {dimension_numbers = #tpu.dot_dimension_numbers<[1], [0], [0], [1], [0, 0, 1, 1], [], []>} : vector<16x80xbf16>, vector<80x128xbf16>, vector<16x128xf32> -> vector<16x128xf32>
    %16 = arith.addf %10, %15 : vector<16x128xf32>
    %c0_17 = arith.constant 0 : index
    %c3 = arith.constant 3 : index
    %c0_18 = arith.constant 0 : index
    %17 = vector.load %arg1[%c0_17, %c3, %c0_18] : memref<1x20x80xbf16, #tpu.memory_space<vmem>>, vector<1x16x80xbf16>
    %18 = vector.shape_cast %17 : vector<1x16x80xbf16> to vector<16x80xbf16>
    %c3_19 = arith.constant 3 : index
    %c0_20 = arith.constant 0 : index
    %c0_21 = arith.constant 0 : index
    %19 = vector.load %arg2[%c3_19, %c0_20, %c0_21] : memref<5x80x128xbf16, #tpu.memory_space<vmem>>, vector<1x80x128xbf16>
    %20 = vector.shape_cast %19 : vector<1x80x128xbf16> to vector<80x128xbf16>
    %cst_22 = arith.constant dense<0.000000e+00> : vector<16x128xf32>
    %21 = tpu.matmul %18, %20, %cst_22 {dimension_numbers = #tpu.dot_dimension_numbers<[1], [0], [0], [1], [0, 0, 1, 1], [], []>} : vector<16x80xbf16>, vector<80x128xbf16>, vector<16x128xf32> -> vector<16x128xf32>
    %22 = arith.addf %16, %21 : vector<16x128xf32>
    %c0_23 = arith.constant 0 : index
    %c4 = arith.constant 4 : index
    %c0_24 = arith.constant 0 : index
    %23 = vector.load %arg1[%c0_23, %c4, %c0_24] : memref<1x20x80xbf16, #tpu.memory_space<vmem>>, vector<1x16x80xbf16>
    %24 = vector.shape_cast %23 : vector<1x16x80xbf16> to vector<16x80xbf16>
    %c4_25 = arith.constant 4 : index
    %c0_26 = arith.constant 0 : index
    %c0_27 = arith.constant 0 : index
    %25 = vector.load %arg2[%c4_25, %c0_26, %c0_27] : memref<5x80x128xbf16, #tpu.memory_space<vmem>>, vector<1x80x128xbf16>
    %26 = vector.shape_cast %25 : vector<1x80x128xbf16> to vector<80x128xbf16>
    %cst_28 = arith.constant dense<0.000000e+00> : vector<16x128xf32>
    %27 = tpu.matmul %24, %26, %cst_28 {dimension_numbers = #tpu.dot_dimension_numbers<[1], [0], [0], [1], [0, 0, 1, 1], [], []>} : vector<16x80xbf16>, vector<80x128xbf16>, vector<16x128xf32> -> vector<16x128xf32>
    %28 = arith.addf %22, %27 : vector<16x128xf32>
    %c0_29 = arith.constant 0 : index
    %c0_30 = arith.constant 0 : index
    %29 = vector.load %arg3[%c0_29, %c0_30] : memref<1x128xf32, #tpu.memory_space<vmem>>, vector<1x128xf32>
    %30 = vector.broadcast %29 : vector<1x128xf32> to vector<16x128xf32>
    %31 = arith.addf %28, %30 : vector<16x128xf32>
    %cst_31 = arith.constant 0.000000e+00 : f32
    %32 = vector.broadcast %cst_31 : f32 to vector<16x128xf32>
    %33 = arith.maximumf %31, %32 : vector<16x128xf32>
    %c0_32 = arith.constant 0 : index
    %c0_33 = arith.constant 0 : index
    %34 = vector.load %arg6[%c0_32, %c0_33] : memref<16x128xf32, #tpu.memory_space<vmem>>, vector<16x128xf32>
    tpu.vector_store %arg6[%c0_32, %c0_33], %33 {strides = array<i32>} : memref<16x128xf32, #tpu.memory_space<vmem>>, vector<16x128xf32>,
    %c0_34 = arith.constant 0 : index
    %c0_35 = arith.constant 0 : index
    %35 = tpu.strided_load %arg6[%c0_34, %c0_35] {strides = array<i32: 2, 1>} : memref<16x128xf32, #tpu.memory_space<vmem>>, vector<8x128xf32>
    %c1_36 = arith.constant 1 : index
    %c0_37 = arith.constant 0 : index
    %36 = tpu.strided_load %arg6[%c1_36, %c0_37] {strides = array<i32: 2, 1>} : memref<16x128xf32, #tpu.memory_space<vmem>>, vector<8x128xf32>
    %37 = arith.addf %35, %36 : vector<8x128xf32>
    %c0_38 = arith.constant 0 : index
    %c0_39 = arith.constant 0 : index
    %38 = vector.load %arg4[%c0_38, %c0_39] : memref<128x128xf32, #tpu.memory_space<vmem>>, vector<128x128xf32>
    %cst_40 = arith.constant dense<0.000000e+00> : vector<8x128xf32>
    %39 = tpu.matmul %37, %38, %cst_40 {dimension_numbers = #tpu.dot_dimension_numbers<[1], [0], [0], [1], [0, 0, 1, 1], [], []>} : vector<8x128xf32>, vector<128x128xf32>, vector<8x128xf32> -> vector<8x128xf32>
    %c0_41 = arith.constant 0 : index
    %c0_42 = arith.constant 0 : index
    %40 = vector.load %arg5[%c0_41, %c0_42] : memref<8x128xf32, #tpu.memory_space<vmem>>, vector<8x128xf32>
    tpu.vector_store %arg5[%c0_41, %c0_42], %39 {strides = array<i32>} : memref<8x128xf32, #tpu.memory_space<vmem>>, vector<8x128xf32>,
    return
  }
  func.func @transform_0(%arg0: i32) -> (i32, i32, i32) {
    %c0_i32 = arith.constant 0 : i32
    %c0_i32_0 = arith.constant 0 : i32
    %c0_i32_1 = arith.constant 0 : i32
    return %arg0, %c0_i32, %c0_i32_0 : i32, i32, i32
  }
  func.func @transform_1(%arg0: i32) -> (i32, i32, i32) {
    %c0_i32 = arith.constant 0 : i32
    %c0_i32_0 = arith.constant 0 : i32
    %c0_i32_1 = arith.constant 0 : i32
    %c0_i32_2 = arith.constant 0 : i32
    return %c0_i32, %c0_i32_0, %c0_i32_1 : i32, i32, i32
  }
  func.func @transform_2(%arg0: i32) -> (i32, i32) {
    %c0_i32 = arith.constant 0 : i32
    %c0_i32_0 = arith.constant 0 : i32
    %c0_i32_1 = arith.constant 0 : i32
    return %c0_i32, %c0_i32_0 : i32, i32
  }
  func.func @transform_3(%arg0: i32) -> (i32, i32) {
    %c0_i32 = arith.constant 0 : i32
    %c0_i32_0 = arith.constant 0 : i32
    %c0_i32_1 = arith.constant 0 : i32
    return %c0_i32, %c0_i32_0 : i32, i32
  }
  func.func @transform_4(%arg0: i32) -> (i32, i32) {
    %c0_i32 = arith.constant 0 : i32
    %c0_i32_0 = arith.constant 0 : i32
    return %arg0, %c0_i32 : i32, i32
  }
}

</mosaic_0001>

<llo_original>
// kernel: tile.8
$region0: #{tile.8}
  #allocation0 [shape = 's32[1]{0}', space=sflag, size = 0x4, scoped, tag = 'scoped memory for tile.8']
  %s0 = inlined_call_operand.vmem [shape: f32[8], index: 0, kind: input, shape index: {}]
  %s1 = inlined_call_operand.vmem [shape: f32[16,8], index: 1, kind: output, shape index: {}]
  // Predicated region
  $region2: #{tile.8} parent=0 // pred_check
    _
  $region3: #{tile.8} parent=0 // pred_check_branch
    %3 = sbr.rel (0) target = $region5
  $region4: #{tile.8} parent=0 // pred_region
    _
  $region5: #{tile.8} parent=0 // pred_fallthru
    _
  %v4 = vld [vmem:[%s0] ss:$0 sm:$0xff]
  %5 = vst [vmem:[%s1] sm:$0xff] %v4
  %s6 = scalar_lea.vmem %s1, 8
  %7 = vst [vmem:[%s6] sm:$0xff] %v4

// kernel: conv_block5x5_forward.1
$region0: #{conv_block5x5_forward.1}
  #allocation0 [shape = 'u32[]', space=smem, size = 0x4, offset = 0x4, fixed_abs, tag = 'smem constant byte address 0x4 - core index']
  #allocation1 [shape = 'u32[144,128]{1,0:T(1,128)}', space=vmem, size = 0x12000, scoped, tag = 'internal scratch']
  #allocation2 [shape = 'f32[16,128]{1,0:T(8,128)}', space=vmem, size = 0x2000, scoped, tag = 'scratch operand']
  %s0 = inlined_call_operand.hbm [shape: bf16[2,20,80], index: 0, kind: input, shape index: {}]
  %s1 = inlined_call_operand.hbm [shape: bf16[5,80,128], index: 1, kind: input, shape index: {}]
  %s2 = inlined_call_operand.hbm [shape: f32[1,128], index: 2, kind: input, shape index: {}]
  %s3 = inlined_call_operand.hbm [shape: f32[128,128], index: 3, kind: input, shape index: {}]
  %s4 = inlined_call_operand.hbm [shape: f32[16,128], index: 4, kind: output, shape index: {}]
  %s5 = sld [smem:[#allocation0]]
  $region65: #{conv_block5x5_forward.1} parent=0
    _
  %s7 = ssub.s32 1, %s5
  %s8 = scalar_select 0, %s7, %s5
  $region1: #{conv_block5x5_forward.1} parent=0
    #allocation3 [shape = 'u8[12288]{0}', space=vmem, size = 0x3000, scoped, tag = 'input window, operand 0']
    #allocation4 [shape = 's32[2]{0}', space=sflag, size = 0x8, scoped, tag = 'scoped memory for conv_block5x5_forward.1']
    #allocation5 [shape = 's32[2]{0}', space=sflag, size = 0x8, scoped, tag = 'scoped memory for conv_block5x5_forward.1']
    #allocation6 [shape = 'u8[102400]{0}', space=vmem, size = 0x19000, scoped, tag = 'input window, operand 1, single buffered']
    #allocation7 [shape = 's32[1]{0}', space=sflag, size = 0x4, scoped, tag = 'scoped memory for conv_block5x5_forward.1']
    #allocation8 [shape = 'u8[512]{0}', space=vmem, size = 0x400, scoped, tag = 'input window, operand 2, single buffered']
    #allocation9 [shape = 'u8[65536]{0}', space=vmem, size = 0x10000, scoped, tag = 'input window, operand 3, single buffered']
    #allocation10 [shape = 's32[1]{0}', space=sflag, size = 0x4, scoped, tag = 'scoped memory for conv_block5x5_forward.1']
    #allocation11 [shape = 'u8[8192]{0}', space=vmem, size = 0x2000, scoped, tag = 'output window, operand 0']
    %9 = vsyncpa [#allocation4], 0
    %s10 = scalar_lea.sflag [#allocation4], 1
    %11 = vsyncpa %s10, 0
    %12 = vsyncpa [#allocation7], 0
    %13 = vsyncpa [#allocation10], 0
    %14 = vsyncpa [#allocation5], 0
    %s15 = scalar_lea.sflag [#allocation5], 1
    %16 = vsyncpa %s15, 0
    loop: start=0, step=1, limit=4
    $region2: #{conv_block5x5_forward.1} parent=1 // loop_pre_header
      _
    $region3: #{conv_block5x5_forward.1} parent=1 // loop_header
      %s18 = sphi 0, %s22
      %p19 = scmp.ge.s32.totalorder %s18, 4
      %s28 = sphi 0, %s30
      %s31 = sphi 0, %s28
      %s32 = sphi 0, %s31
      %s48 = sphi 0, %s32
      %s52 = sphi 0, %s52
      %s54 = sphi 0, %s52
      %s55 = sphi 0, %s54
      %s69 = sphi 0, %s55
      %s73 = sphi 0, %s73
      %s75 = sphi 0, %s73
      %s76 = sphi 0, %s75
      %s90 = sphi 0, %s76
      %s94 = sphi 0, %s94
      %s96 = sphi 0, %s94
      %s97 = sphi 0, %s96
      %s111 = sphi 0, %s97
      %s117 = sphi 0, %s119
      %s120 = sphi 0, %s117
      %s121 = sphi 0, %s120
      %s137 = sphi 0, %s121
    $region4: #{conv_block5x5_forward.1} parent=1 // loop_header_branch
      %21 = sbr.rel (%p19) target = $region8
    $region5: #{conv_block5x5_forward.1} parent=1 // loop_body
      %s23 = ssub.s32 %s18, 1
      %s24 = ssub.s32 %s18, 2
      %s25 = sadd.s32 %s18, 1
      %s26 = ssub.s32 %s18, %s25
      %p27 = scmp.eq.s32.totalorder %s26, 0
      %s29 = sadd.s32 %s28, 1
      %s30 = scalar_select %p27, %s28, %s29
      %p33 = pneg %p27
      %p34 = scmp.eq.s32.totalorder %s18, 1
      %p35 = por %p33, %p34
      %p36 = scmp.ne.s32.totalorder %s28, %s31
      %p37 = scmp.eq.s32.totalorder %s18, 0
      %p38 = por %p36, %p37
      %p39 = scmp.ne.s32.totalorder %s28, %s31
      %p40 = scmp.eq.s32.totalorder %s23, 1
      %p41 = por %p39, %p40
      %p42 = scmp.ne.s32.totalorder %s31, %s32
      %p43 = scmp.eq.s32.totalorder %s23, 0
      %p44 = por %p42, %p43
      %p45 = scmp.ne.s32.totalorder %s31, %s32
      %p46 = scmp.eq.s32.totalorder %s24, 1
      %p47 = por %p45, %p46
      %p49 = scmp.ne.s32.totalorder %s32, %s48
      %p50 = scmp.eq.s32.totalorder %s24, 0
      %p51 = por %p49, %p50
      %s53 = sadd.s32 %s52, 1
      %p56 = scmp.eq.s32.totalorder %s18, 1
      %p57 = scmp.ne.s32.totalorder %s52, %s54
      %p58 = scmp.eq.s32.totalorder %s18, 0
      %p59 = por %p57, %p58
      %p60 = scmp.ne.s32.totalorder %s52, %s54
      %p61 = scmp.eq.s32.totalorder %s23, 1
      %p62 = por %p60, %p61
      %p63 = scmp.ne.s32.totalorder %s54, %s55
      %p64 = scmp.eq.s32.totalorder %s23, 0
      %p65 = por %p63, %p64
      %p66 = scmp.ne.s32.totalorder %s54, %s55
      %p67 = scmp.eq.s32.totalorder %s24, 1
      %p68 = por %p66, %p67
      %p70 = scmp.ne.s32.totalorder %s55, %s69
      %p71 = scmp.eq.s32.totalorder %s24, 0
      %p72 = por %p70, %p71
      %s74 = sadd.s32 %s73, 1
      %p77 = scmp.eq.s32.totalorder %s18, 1
      %p78 = scmp.ne.s32.totalorder %s73, %s75
      %p79 = scmp.eq.s32.totalorder %s18, 0
      %p80 = por %p78, %p79
      %p81 = scmp.ne.s32.totalorder %s73, %s75
      %p82 = scmp.eq.s32.totalorder %s23, 1
      %p83 = por %p81, %p82
      %p84 = scmp.ne.s32.totalorder %s75, %s76
      %p85 = scmp.eq.s32.totalorder %s23, 0
      %p86 = por %p84, %p85
      %p87 = scmp.ne.s32.totalorder %s75, %s76
      %p88 = scmp.eq.s32.totalorder %s24, 1
      %p89 = por %p87, %p88
      %p91 = scmp.ne.s32.totalorder %s76, %s90
      %p92 = scmp.eq.s32.totalorder %s24, 0
      %p93 = por %p91, %p92
      %s95 = sadd.s32 %s94, 1
      %p98 = scmp.eq.s32.totalorder %s18, 1
      %p99 = scmp.ne.s32.totalorder %s94, %s96
      %p100 = scmp.eq.s32.totalorder %s18, 0
      %p101 = por %p99, %p100
      %p102 = scmp.ne.s32.totalorder %s94, %s96
      %p103 = scmp.eq.s32.totalorder %s23, 1
      %p104 = por %p102, %p103
      %p105 = scmp.ne.s32.totalorder %s96, %s97
      %p106 = scmp.eq.s32.totalorder %s23, 0
      %p107 = por %p105, %p106
      %p108 = scmp.ne.s32.totalorder %s96, %s97
      %p109 = scmp.eq.s32.totalorder %s24, 1
      %p110 = por %p108, %p109
      %p112 = scmp.ne.s32.totalorder %s97, %s111
      %p113 = scmp.eq.s32.totalorder %s24, 0
      %p114 = por %p112, %p113
      %s115 = ssub.s32 %s18, %s25
      %p116 = scmp.eq.s32.totalorder %s115, 0
      %s118 = sadd.s32 %s117, 1
      %s119 = scalar_select %p116, %s117, %s118
      %p122 = pneg %p116
      %p123 = scmp.eq.s32.totalorder %s18, 1
      %p124 = por %p122, %p123
      %p125 = scmp.ne.s32.totalorder %s117, %s120
      %p126 = scmp.eq.s32.totalorder %s18, 0
      %p127 = por %p125, %p126
      %p128 = scmp.ne.s32.totalorder %s117, %s120
      %p129 = scmp.eq.s32.totalorder %s23, 1
      %p130 = por %p128, %p129
      %p131 = scmp.ne.s32.totalorder %s120, %s121
      %p132 = scmp.eq.s32.totalorder %s23, 0
      %p133 = por %p131, %p132
      %p134 = scmp.ne.s32.totalorder %s120, %s121
      %p135 = scmp.eq.s32.totalorder %s24, 1
      %p136 = por %p134, %p135
      %p138 = scmp.ne.s32.totalorder %s121, %s137
      %p139 = scmp.eq.s32.totalorder %s24, 0
      %p140 = por %p138, %p139
      %p141 = scmp.le.s32.totalorder 1, %s18
      %p142 = scmp.lt.s32.totalorder %s18, 3
      %p143 = pnand %p141, %p142
      %p144 = pneg %p143
      // Predicated region
      $region9: #{conv_block5x5_forward.1} parent=5 // pred_check
        _
      $region10: #{conv_block5x5_forward.1} parent=5 // pred_check_branch
        %146 = sbr.rel (%p143) target = $region12
      $region11: #{conv_block5x5_forward.1} parent=5 // pred_region
        %s147 = ssub.s32 %s18, 1
        // Predicated region
        $region13: #{conv_block5x5_forward.1} parent=11 // pred_check
          %p148 = pneg %p65
        $region14: #{conv_block5x5_forward.1} parent=11 // pred_check_branch
          %150 = sbr.rel (%p148) target = $region16
        $region15: #{conv_block5x5_forward.1} parent=11 // pred_region
          %s152 = ssub.s32 3200, 3200
          %153 = vsyncadd [#allocation7], %s152
          %s154 = sshll.u32 [#allocation6], 4
          %s155 = int_to_ptr.vmem [resolvable:$true] %s154
          %160 = dma.hbm_to_vmem [thread:$0]  %s1, 3200, %s155, [#allocation7], 64, 64, 4
        $region16: #{conv_block5x5_forward.1} parent=11 // pred_fallthru
          _
        // Predicated region
        $region17: #{conv_block5x5_forward.1} parent=11 // pred_check
          %p161 = pneg %p86
        $region18: #{conv_block5x5_forward.1} parent=11 // pred_check_branch
          %163 = sbr.rel (%p161) target = $region20
        $region19: #{conv_block5x5_forward.1} parent=11 // pred_region
          %s165 = ssub.s32 16, 16
          %166 = vsyncadd [#allocation7], %s165
          %s168 = sshll.u32 [#allocation8], 4
          %s169 = int_to_ptr.vmem [resolvable:$true] %s168
          %171 = dma.hbm_to_vmem [thread:$0]  %s2, 16, %s169, [#allocation7]
        $region20: #{conv_block5x5_forward.1} parent=11 // pred_fallthru
          _
        // Predicated region
        $region21: #{conv_block5x5_forward.1} parent=11 // pred_check
          %p172 = pneg %p107
        $region22: #{conv_block5x5_forward.1} parent=11 // pred_check_branch
          %174 = sbr.rel (%p172) target = $region24
        $region23: #{conv_block5x5_forward.1} parent=11 // pred_region
          %s176 = ssub.s32 2048, 2048
          %177 = vsyncadd [#allocation10], %s176
          %s178 = sshll.u32 [#allocation9], 4
          %s179 = int_to_ptr.vmem [resolvable:$true] %s178
          %184 = dma.hbm_to_vmem [thread:$0]  %s3, 2048, %s179, [#allocation10], 128, 128, 8
        $region24: #{conv_block5x5_forward.1} parent=11 // pred_fallthru
          _
      $region12: #{conv_block5x5_forward.1} parent=5 // pred_fallthru
        _
      %p185 = scmp.lt.s32.totalorder %s18, 2
      // Predicated region
      $region25: #{conv_block5x5_forward.1} parent=5 // pred_check
        %p186 = pneg %p185
      $region26: #{conv_block5x5_forward.1} parent=5 // pred_check_branch
        %188 = sbr.rel (%p186) target = $region28
      $region27: #{conv_block5x5_forward.1} parent=5 // pred_region
        // Predicated region
        $region29: #{conv_block5x5_forward.1} parent=27 // pred_check
          %p189 = pneg %p38
        $region30: #{conv_block5x5_forward.1} parent=27 // pred_check_branch
          %191 = sbr.rel (%p189) target = $region32
        $region31: #{conv_block5x5_forward.1} parent=27 // pred_region
          %s192 = sand.u32 %s28, 1
          %s193 = scalar_lea.sflag [#allocation4], %s192
          %s194 = sand.u32 %s28, 1
          %s195 = smul.addr %s194, 12
          %s196 = scalar_lea.vmem [#allocation3], %s195
          %s198 = ssub.s32 192, 192
          %199 = vsyncadd %s193, %s198
          %s200 = smul.addr %s18, 3
          %s201 = smul.addr %s200, 64
          %s202 = scalar_lea.hbm %s0, %s201
          %s203 = sshll.u32 %s196, 4
          %s204 = int_to_ptr.vmem [resolvable:$true] %s203
          %209 = dma.hbm_to_vmem [thread:$0]  %s202, 192, %s204, %s193, 64, 64, 4
        $region32: #{conv_block5x5_forward.1} parent=27 // pred_fallthru
          _
      $region28: #{conv_block5x5_forward.1} parent=5 // pred_fallthru
        _
      %p210 = scmp.le.s32.totalorder 1, %s18
      %p211 = scmp.lt.s32.totalorder %s18, 3
      %p212 = pnand %p210, %p211
      %p213 = pneg %p212
      // Predicated region
      $region33: #{conv_block5x5_forward.1} parent=5 // pred_check
        _
      $region34: #{conv_block5x5_forward.1} parent=5 // pred_check_branch
        %215 = sbr.rel (%p212) target = $region36
      $region35: #{conv_block5x5_forward.1} parent=5 // pred_region
        %s216 = ssub.s32 %s18, 1
        %s217 = sand.u32 %s31, 1
        %s218 = scalar_lea.sflag [#allocation4], %s217
        %s219 = sand.u32 %s31, 1
        %s220 = smul.addr %s219, 12
        %s221 = scalar_lea.vmem [#allocation3], %s220
        // Predicated region
        $region37: #{conv_block5x5_forward.1} parent=35 // pred_check
          %p222 = pneg %p44
        $region38: #{conv_block5x5_forward.1} parent=35 // pred_check_branch
          %224 = sbr.rel (%p222) target = $region40
        $region39: #{conv_block5x5_forward.1} parent=35 // pred_region
          %225 = dma.done %s218, 192
        $region40: #{conv_block5x5_forward.1} parent=35 // pred_fallthru
          _
        // Predicated region
        $region41: #{conv_block5x5_forward.1} parent=35 // pred_check
          %p226 = pneg %p65
        $region42: #{conv_block5x5_forward.1} parent=35 // pred_check_branch
          %228 = sbr.rel (%p226) target = $region44
        $region43: #{conv_block5x5_forward.1} parent=35 // pred_region
          %229 = dma.done [#allocation7], 3200
        $region44: #{conv_block5x5_forward.1} parent=35 // pred_fallthru
          _
        // Predicated region
        $region45: #{conv_block5x5_forward.1} parent=35 // pred_check
          %p230 = pneg %p86
        $region46: #{conv_block5x5_forward.1} parent=35 // pred_check_branch
          %232 = sbr.rel (%p230) target = $region48
        $region47: #{conv_block5x5_forward.1} parent=35 // pred_region
          %233 = dma.done [#allocation7], 16
        $region48: #{conv_block5x5_forward.1} parent=35 // pred_fallthru
          _
        // Predicated region
        $region49: #{conv_block5x5_forward.1} parent=35 // pred_check
          %p234 = pneg %p107
        $region50: #{conv_block5x5_forward.1} parent=35 // pred_check_branch
          %236 = sbr.rel (%p234) target = $region52
        $region51: #{conv_block5x5_forward.1} parent=35 // pred_region
          %237 = dma.done [#allocation10], 2048
        $region52: #{conv_block5x5_forward.1} parent=35 // pred_fallthru
          _
        %s238 = sand.u32 %s31, 1
        %s239 = scalar_lea.sflag [#allocation4], %s238
        %s240 = sand.u32 %s31, 1
        %s241 = smul.addr %s240, 12
        %s242 = scalar_lea.vmem [#allocation3], %s241
        %p243 = pneg %p44
        %p244 = pneg %p41
        %p245 = pneg %p65
        %p246 = pneg %p62
        %p247 = pneg %p86
        %p248 = pneg %p83
        %p249 = pneg %p107
        %p250 = pneg %p104
        %p251 = pneg %p133
        %p252 = pneg %p130
        %s253 = sand.u32 %s120, 1
        %s254 = scalar_lea.sflag [#allocation5], %s253
        %s255 = sand.u32 %s120, 1
        %s256 = smul.addr %s255, 8
        %s257 = scalar_lea.vmem [#allocation11], %s256
        %v259 = vld [vmem:[%s221] sm:$0xf]
        %v260 = vld [vmem:[%s221 + $0x4] sm:$0xf]
        %v261 = vld [vmem:[#allocation6] sm:$0xf]
        %v262 = vld [vmem:[#allocation6 + $0x4] sm:$0xf]
        %v263 = vld [vmem:[#allocation6 + $0x8] sm:$0xf]
        %v264 = vld [vmem:[#allocation6 + $0xc] sm:$0xf]
        %v265 = vld [vmem:[#allocation6 + $0x10] sm:$0xf]
        %v266 = vld [vmem:[#allocation6 + $0x14] sm:$0xf]
        %v267 = vld [vmem:[#allocation6 + $0x18] sm:$0xf]
        %v268 = vld [vmem:[#allocation6 + $0x1c] sm:$0xf]
        %v269 = vld [vmem:[#allocation6 + $0x20] sm:$0xf]
        %v270 = vld [vmem:[#allocation6 + $0x24] sm:$0xf]
        %v271 = vld [vmem:[%s221 + $0x8] sm:$0x1]
        %s272 = scalar_lea.vmem [#allocation6], 40
        %v273 = vld [vmem:[%s272] sm:$0xf]
        %v274 = vld [vmem:[%s272 + $0x4] sm:$0xf]
        %v275 = vld [vmem:[%s272 + $0x8] sm:$0xf]
        %v276 = vld [vmem:[%s272 + $0xc] sm:$0xf]
        %v277 = vld [vmem:[%s272 + $0x10] sm:$0xf]
        %v278 = vld [vmem:[%s272 + $0x14] sm:$0xf]
        %v279 = vld [vmem:[%s272 + $0x18] sm:$0xf]
        %v280 = vld [vmem:[%s272 + $0x1c] sm:$0xf]
        %v281 = vld [vmem:[%s272 + $0x20] sm:$0xf]
        %v282 = vld [vmem:[%s272 + $0x24] sm:$0xf]
        %v286 = vunpack.c.l.b16 %v259
        %v287 = vunpack.c.l.b16 %v260
        %v288 = vunpack.c.l.b16 %v271
        %v289 = vpack.c.b16 %v287, %v286
        %v290 = vpack.c.b16 %v288, %v288
        %vm291 = vsmask.f32 7424
        %v293 = vshrl.u32 %v289, 16
        %v295 = vshll.u32 %v289, 16
        %v297 = vrot.slane %v295, 1
        %v298 = vor.u32 %v293, %v297
        %v300 = vshll.u32 %v290, 16
        %v302 = vrot.slane %v300, 1
        %v303 = vsel %vm291, %v298, %v302
        %v314 = vunpack.c.l.b16 %v273
        %v315 = vunpack.c.l.b16 %v274
        %v316 = vunpack.c.l.b16 %v275
        %v317 = vunpack.c.l.b16 %v276
        %v318 = vunpack.c.l.b16 %v277
        %v319 = vunpack.c.l.b16 %v278
        %v320 = vunpack.c.l.b16 %v279
        %v321 = vunpack.c.l.b16 %v280
        %v322 = vunpack.c.l.b16 %v281
        %v323 = vunpack.c.l.b16 %v282
        %v324 = vpack.c.b16 %v315, %v314
        %v325 = vpack.c.b16 %v317, %v316
        %v326 = vpack.c.b16 %v319, %v318
        %v327 = vpack.c.b16 %v321, %v320
        %v328 = vpack.c.b16 %v323, %v322
        %vm334 = vcmask 654336
        %v336 = vsel %vm334, %v303, 0
        %338 = vmatprep.subr.bf16.mxu0 0
        %339 = vmatpush1.bf16.msra.mxu0 %v324
        %340 = vmatprep.subr.bf16.mxu0 0
        %341 = vmatpush1.bf16.msra.mxu0 %v325
        %342 = vmatprep.subr.bf16.mxu0 0
        %343 = vmatpush1.bf16.msra.mxu0 %v326
        %344 = vmatprep.subr.bf16.mxu0 0
        %345 = vmatpush1.bf16.msra.mxu0 %v327
        %346 = vmatprep.subr.bf16.mxu0 0
        %347 = vmatpush1.bf16.msra.mxu0 %v328
        %348 = vmatprep.subr.bf16.mxu0 0
        %349 = vmatpush1.bf16.msra.mxu0 0
        %350 = vmatprep.subr.bf16.mxu0 0
        %351 = vmatpush1.bf16.msra.mxu0 0
        %352 = vmatprep.subr.bf16.mxu0 0
        %353 = vmatpush1.bf16.msra.mxu0 0
        %354 = vmatprep.subr.bf16.mxu0 0
        %355 = vmatpush1.bf16.msra.mxu0 0
        %356 = vmatprep.subr.bf16.mxu0 0
        %357 = vmatpush1.bf16.msra.mxu0 0
        %358 = vmatprep.subr.bf16.mxu0 0
        %359 = vmatpush1.bf16.msra.mxu0 0
        %360 = vmatprep.subr.bf16.mxu0 0
        %361 = vmatpush1.bf16.msra.mxu0 0
        %362 = vmatprep.subr.bf16.mxu0 0
        %363 = vmatpush1.bf16.msra.mxu0 0
        %364 = vmatprep.subr.bf16.mxu0 0
        %365 = vmatpush1.bf16.msra.mxu0 0
        %366 = vmatprep.subr.bf16.mxu0 0
        %367 = vmatpush1.bf16.msra.mxu0 0
        %368 = vmatprep.subr.bf16.mxu0 0
        %369 = vmatpush1.bf16.msra.mxu0 0
        %370 = vmatprep.mubr.bf16.mxu0 0
        %371 = vmatmul.mubr.bf16.gmra.mrb[0].mxu0 %v336
        %v372 = vpop.f32.mrb[0].mxu0
        %v373 = vadd.f32 0.0, %v372
        %v374 = vpop.f32.mrb[0].mxu0
        %v375 = vpop.f32.mrb[0].mxu0
        %v376 = vadd.f32 0.0, %v375
        %v377 = vpop.f32.mrb[0].mxu0
        %378 = vdwg.mxu0
        %v389 = vunpack.c.l.b16 %v261
        %v390 = vunpack.c.l.b16 %v262
        %v391 = vunpack.c.l.b16 %v263
        %v392 = vunpack.c.l.b16 %v264
        %v393 = vunpack.c.l.b16 %v265
        %v394 = vunpack.c.l.b16 %v266
        %v395 = vunpack.c.l.b16 %v267
        %v396 = vunpack.c.l.b16 %v268
        %v397 = vunpack.c.l.b16 %v269
        %v398 = vunpack.c.l.b16 %v270
        %v399 = vpack.c.b16 %v390, %v389
        %v400 = vpack.c.b16 %v392, %v391
        %v401 = vpack.c.b16 %v394, %v393
        %v402 = vpack.c.b16 %v396, %v395
        %v403 = vpack.c.b16 %v398, %v397
        %v409 = vsel %vm334, %v289, 0
        %411 = vmatprep.subr.bf16.mxu0 0
        %412 = vmatpush1.bf16.msra.mxu0 %v399
        %413 = vmatprep.subr.bf16.mxu0 0
        %414 = vmatpush1.bf16.msra.mxu0 %v400
        %415 = vmatprep.subr.bf16.mxu0 0
        %416 = vmatpush1.bf16.msra.mxu0 %v401
        %417 = vmatprep.subr.bf16.mxu0 0
        %418 = vmatpush1.bf16.msra.mxu0 %v402
        %419 = vmatprep.subr.bf16.mxu0 0
        %420 = vmatpush1.bf16.msra.mxu0 %v403
        %421 = vmatprep.subr.bf16.mxu0 0
        %422 = vmatpush1.bf16.msra.mxu0 0
        %423 = vmatprep.subr.bf16.mxu0 0
        %424 = vmatpush1.bf16.msra.mxu0 0
        %425 = vmatprep.subr.bf16.mxu0 0
        %426 = vmatpush1.bf16.msra.mxu0 0
        %427 = vmatprep.subr.bf16.mxu0 0
        %428 = vmatpush1.bf16.msra.mxu0 0
        %429 = vmatprep.subr.bf16.mxu0 0
        %430 = vmatpush1.bf16.msra.mxu0 0
        %431 = vmatprep.subr.bf16.mxu0 0
        %432 = vmatpush1.bf16.msra.mxu0 0
        %433 = vmatprep.subr.bf16.mxu0 0
        %434 = vmatpush1.bf16.msra.mxu0 0
        %435 = vmatprep.subr.bf16.mxu0 0
        %436 = vmatpush1.bf16.msra.mxu0 0
        %437 = vmatprep.subr.bf16.mxu0 0
        %438 = vmatpush1.bf16.msra.mxu0 0
        %439 = vmatprep.subr.bf16.mxu0 0
        %440 = vmatpush1.bf16.msra.mxu0 0
        %441 = vmatprep.subr.bf16.mxu0 0
        %442 = vmatpush1.bf16.msra.mxu0 0
        %443 = vmatprep.mubr.bf16.mxu0 0
        %444 = vmatmul.mubr.bf16.gmra.mrb[0].mxu0 %v409
        %v445 = vpop.f32.mrb[0].mxu0
        %v446 = vadd.f32 %v373, %v445
        %v447 = vpop.f32.mrb[0].mxu0
        %v448 = vpop.f32.mrb[0].mxu0
        %v449 = vadd.f32 %v376, %v448
        %v450 = vpop.f32.mrb[0].mxu0
        %451 = vdwg.mxu0
        %v452 = vld [vmem:[%s221] sm:$0xe]
        %s453 = scalar_lea.vmem [#allocation6], 80
        %v454 = vld [vmem:[%s453] sm:$0xf]
        %v455 = vld [vmem:[%s453 + $0x4] sm:$0xf]
        %v456 = vld [vmem:[%s453 + $0x8] sm:$0xf]
        %v457 = vld [vmem:[%s453 + $0xc] sm:$0xf]
        %v458 = vld [vmem:[%s453 + $0x10] sm:$0xf]
        %v459 = vld [vmem:[%s453 + $0x14] sm:$0xf]
        %v460 = vld [vmem:[%s453 + $0x18] sm:$0xf]
        %v461 = vld [vmem:[%s453 + $0x1c] sm:$0xf]
        %v462 = vld [vmem:[%s453 + $0x20] sm:$0xf]
        %v463 = vld [vmem:[%s453 + $0x24] sm:$0xf]
        %v465 = vunpack.c.l.b16 %v452
        %v466 = vpack.c.b16 %v287, %v465
        %vm467 = vcmask 1046528
        %v468 = vrot.slane %v466, 1
        %v469 = vrot.slane %v290, 1
        %v470 = vsel %vm467, %v468, %v469
        %v481 = vunpack.c.l.b16 %v454
        %v482 = vunpack.c.l.b16 %v455
        %v483 = vunpack.c.l.b16 %v456
        %v484 = vunpack.c.l.b16 %v457
        %v485 = vunpack.c.l.b16 %v458
        %v486 = vunpack.c.l.b16 %v459
        %v487 = vunpack.c.l.b16 %v460
        %v488 = vunpack.c.l.b16 %v461
        %v489 = vunpack.c.l.b16 %v462
        %v490 = vunpack.c.l.b16 %v463
        %v491 = vpack.c.b16 %v482, %v481
        %v492 = vpack.c.b16 %v484, %v483
        %v493 = vpack.c.b16 %v486, %v485
        %v494 = vpack.c.b16 %v488, %v487
        %v495 = vpack.c.b16 %v490, %v489
        %v502 = vsel %vm334, %v470, 0
        %504 = vmatprep.subr.bf16.mxu0 0
        %505 = vmatpush1.bf16.msra.mxu0 %v491
        %506 = vmatprep.subr.bf16.mxu0 0
        %507 = vmatpush1.bf16.msra.mxu0 %v492
        %508 = vmatprep.subr.bf16.mxu0 0
        %509 = vmatpush1.bf16.msra.mxu0 %v493
        %510 = vmatprep.subr.bf16.mxu0 0
        %511 = vmatpush1.bf16.msra.mxu0 %v494
        %512 = vmatprep.subr.bf16.mxu0 0
        %513 = vmatpush1.bf16.msra.mxu0 %v495
        %514 = vmatprep.subr.bf16.mxu0 0
        %515 = vmatpush1.bf16.msra.mxu0 0
        %516 = vmatprep.subr.bf16.mxu0 0
        %517 = vmatpush1.bf16.msra.mxu0 0
        %518 = vmatprep.subr.bf16.mxu0 0
        %519 = vmatpush1.bf16.msra.mxu0 0
        %520 = vmatprep.subr.bf16.mxu0 0
        %521 = vmatpush1.bf16.msra.mxu0 0
        %522 = vmatprep.subr.bf16.mxu0 0
        %523 = vmatpush1.bf16.msra.mxu0 0
        %524 = vmatprep.subr.bf16.mxu0 0
        %525 = vmatpush1.bf16.msra.mxu0 0
        %526 = vmatprep.subr.bf16.mxu0 0
        %527 = vmatpush1.bf16.msra.mxu0 0
        %528 = vmatprep.subr.bf16.mxu0 0
        %529 = vmatpush1.bf16.msra.mxu0 0
        %530 = vmatprep.subr.bf16.mxu0 0
        %531 = vmatpush1.bf16.msra.mxu0 0
        %532 = vmatprep.subr.bf16.mxu0 0
        %533 = vmatpush1.bf16.msra.mxu0 0
        %534 = vmatprep.subr.bf16.mxu0 0
        %535 = vmatpush1.bf16.msra.mxu0 0
        %536 = vmatprep.mubr.bf16.mxu0 0
        %537 = vmatmul.mubr.bf16.gmra.mrb[0].mxu0 %v502
        %v538 = vpop.f32.mrb[0].mxu0
        %v539 = vadd.f32 0.0, %v538
        %v540 = vpop.f32.mrb[0].mxu0
        %v541 = vpop.f32.mrb[0].mxu0
        %v542 = vadd.f32 0.0, %v541
        %v543 = vpop.f32.mrb[0].mxu0
        %544 = vdwg.mxu0
        %v545 = vadd.f32 %v446, %v539
        %v546 = vadd.f32 %v449, %v542
        %v547 = vld [vmem:[%s221 + $0x8] sm:$0x3]
        %s548 = scalar_lea.vmem [#allocation6], 120
        %v549 = vld [vmem:[%s548] sm:$0xf]
        %v550 = vld [vmem:[%s548 + $0x4] sm:$0xf]
        %v551 = vld [vmem:[%s548 + $0x8] sm:$0xf]
        %v552 = vld [vmem:[%s548 + $0xc] sm:$0xf]
        %v553 = vld [vmem:[%s548 + $0x10] sm:$0xf]
        %v554 = vld [vmem:[%s548 + $0x14] sm:$0xf]
        %v555 = vld [vmem:[%s548 + $0x18] sm:$0xf]
        %v556 = vld [vmem:[%s548 + $0x1c] sm:$0xf]
        %v557 = vld [vmem:[%s548 + $0x20] sm:$0xf]
        %v558 = vld [vmem:[%s548 + $0x24] sm:$0xf]
        %v560 = vunpack.c.l.b16 %v547
        %v561 = vpack.c.b16 %v560, %v560
        %vm562 = vsmask.f32 6400
        %v564 = vshrl.u32 %v466, 16
        %v566 = vrot.slane %v564, 1
        %v567 = vshll.u32 %v466, 16
        %v569 = vrot.slane %v567, 2
        %v570 = vor.u32 %v566, %v569
        %v572 = vshrl.u32 %v561, 16
        %v574 = vrot.slane %v572, 1
        %v575 = vshll.u32 %v561, 16
        %v577 = vrot.slane %v575, 2
        %v578 = vor.u32 %v574, %v577
        %v579 = vsel %vm562, %v570, %v578
        %v590 = vunpack.c.l.b16 %v549
        %v591 = vunpack.c.l.b16 %v550
        %v592 = vunpack.c.l.b16 %v551
        %v593 = vunpack.c.l.b16 %v552
        %v594 = vunpack.c.l.b16 %v553
        %v595 = vunpack.c.l.b16 %v554
        %v596 = vunpack.c.l.b16 %v555
        %v597 = vunpack.c.l.b16 %v556
        %v598 = vunpack.c.l.b16 %v557
        %v599 = vunpack.c.l.b16 %v558
        %v600 = vpack.c.b16 %v591, %v590
        %v601 = vpack.c.b16 %v593, %v592
        %v602 = vpack.c.b16 %v595, %v594
        %v603 = vpack.c.b16 %v597, %v596
        %v604 = vpack.c.b16 %v599, %v598
        %v611 = vsel %vm334, %v579, 0
        %613 = vmatprep.subr.bf16.mxu0 0
        %614 = vmatpush1.bf16.msra.mxu0 %v600
        %615 = vmatprep.subr.bf16.mxu0 0
        %616 = vmatpush1.bf16.msra.mxu0 %v601
        %617 = vmatprep.subr.bf16.mxu0 0
        %618 = vmatpush1.bf16.msra.mxu0 %v602
        %619 = vmatprep.subr.bf16.mxu0 0
        %620 = vmatpush1.bf16.msra.mxu0 %v603
        %621 = vmatprep.subr.bf16.mxu0 0
        %622 = vmatpush1.bf16.msra.mxu0 %v604
        %623 = vmatprep.subr.bf16.mxu0 0
        %624 = vmatpush1.bf16.msra.mxu0 0
        %625 = vmatprep.subr.bf16.mxu0 0
        %626 = vmatpush1.bf16.msra.mxu0 0
        %627 = vmatprep.subr.bf16.mxu0 0
        %628 = vmatpush1.bf16.msra.mxu0 0
        %629 = vmatprep.subr.bf16.mxu0 0
        %630 = vmatpush1.bf16.msra.mxu0 0
        %631 = vmatprep.subr.bf16.mxu0 0
        %632 = vmatpush1.bf16.msra.mxu0 0
        %633 = vmatprep.subr.bf16.mxu0 0
        %634 = vmatpush1.bf16.msra.mxu0 0
        %635 = vmatprep.subr.bf16.mxu0 0
        %636 = vmatpush1.bf16.msra.mxu0 0
        %637 = vmatprep.subr.bf16.mxu0 0
        %638 = vmatpush1.bf16.msra.mxu0 0
        %639 = vmatprep.subr.bf16.mxu0 0
        %640 = vmatpush1.bf16.msra.mxu0 0
        %641 = vmatprep.subr.bf16.mxu0 0
        %642 = vmatpush1.bf16.msra.mxu0 0
        %643 = vmatprep.subr.bf16.mxu0 0
        %644 = vmatpush1.bf16.msra.mxu0 0
        %645 = vmatprep.mubr.bf16.mxu0 0
        %646 = vmatmul.mubr.bf16.gmra.mrb[0].mxu0 %v611
        %v647 = vpop.f32.mrb[0].mxu0
        %v648 = vadd.f32 0.0, %v647
        %v649 = vpop.f32.mrb[0].mxu0
        %v650 = vpop.f32.mrb[0].mxu0
        %v651 = vadd.f32 0.0, %v650
        %v652 = vpop.f32.mrb[0].mxu0
        %653 = vdwg.mxu0
        %v654 = vadd.f32 %v545, %v648
        %v655 = vadd.f32 %v546, %v651
        %v656 = vld [vmem:[%s221] sm:$0xc]
        %s657 = scalar_lea.vmem [#allocation6], 160
        %v658 = vld [vmem:[%s657] sm:$0xf]
        %v659 = vld [vmem:[%s657 + $0x4] sm:$0xf]
        %v660 = vld [vmem:[%s657 + $0x8] sm:$0xf]
        %v661 = vld [vmem:[%s657 + $0xc] sm:$0xf]
        %v662 = vld [vmem:[%s657 + $0x10] sm:$0xf]
        %v663 = vld [vmem:[%s657 + $0x14] sm:$0xf]
        %v664 = vld [vmem:[%s657 + $0x18] sm:$0xf]
        %v665 = vld [vmem:[%s657 + $0x1c] sm:$0xf]
        %v666 = vld [vmem:[%s657 + $0x20] sm:$0xf]
        %v667 = vld [vmem:[%s657 + $0x24] sm:$0xf]
        %v669 = vunpack.c.l.b16 %v656
        %v670 = vpack.c.b16 %v287, %v669
        %vm671 = vcmask 1045504
        %v672 = vrot.slane %v670, 2
        %v673 = vrot.slane %v561, 2
        %v674 = vsel %vm671, %v672, %v673
        %v685 = vunpack.c.l.b16 %v658
        %v686 = vunpack.c.l.b16 %v659
        %v687 = vunpack.c.l.b16 %v660
        %v688 = vunpack.c.l.b16 %v661
        %v689 = vunpack.c.l.b16 %v662
        %v690 = vunpack.c.l.b16 %v663
        %v691 = vunpack.c.l.b16 %v664
        %v692 = vunpack.c.l.b16 %v665
        %v693 = vunpack.c.l.b16 %v666
        %v694 = vunpack.c.l.b16 %v667
        %v695 = vpack.c.b16 %v686, %v685
        %v696 = vpack.c.b16 %v688, %v687
        %v697 = vpack.c.b16 %v690, %v689
        %v698 = vpack.c.b16 %v692, %v691
        %v699 = vpack.c.b16 %v694, %v693
        %v706 = vsel %vm334, %v674, 0
        %708 = vmatprep.subr.bf16.mxu0 0
        %709 = vmatpush1.bf16.msra.mxu0 %v695
        %710 = vmatprep.subr.bf16.mxu0 0
        %711 = vmatpush1.bf16.msra.mxu0 %v696
        %712 = vmatprep.subr.bf16.mxu0 0
        %713 = vmatpush1.bf16.msra.mxu0 %v697
        %714 = vmatprep.subr.bf16.mxu0 0
        %715 = vmatpush1.bf16.msra.mxu0 %v698
        %716 = vmatprep.subr.bf16.mxu0 0
        %717 = vmatpush1.bf16.msra.mxu0 %v699
        %718 = vmatprep.subr.bf16.mxu0 0
        %719 = vmatpush1.bf16.msra.mxu0 0
        %720 = vmatprep.subr.bf16.mxu0 0
        %721 = vmatpush1.bf16.msra.mxu0 0
        %722 = vmatprep.subr.bf16.mxu0 0
        %723 = vmatpush1.bf16.msra.mxu0 0
        %724 = vmatprep.subr.bf16.mxu0 0
        %725 = vmatpush1.bf16.msra.mxu0 0
        %726 = vmatprep.subr.bf16.mxu0 0
        %727 = vmatpush1.bf16.msra.mxu0 0
        %728 = vmatprep.subr.bf16.mxu0 0
        %729 = vmatpush1.bf16.msra.mxu0 0
        %730 = vmatprep.subr.bf16.mxu0 0
        %731 = vmatpush1.bf16.msra.mxu0 0
        %732 = vmatprep.subr.bf16.mxu0 0
        %733 = vmatpush1.bf16.msra.mxu0 0
        %734 = vmatprep.subr.bf16.mxu0 0
        %735 = vmatpush1.bf16.msra.mxu0 0
        %736 = vmatprep.subr.bf16.mxu0 0
        %737 = vmatpush1.bf16.msra.mxu0 0
        %738 = vmatprep.subr.bf16.mxu0 0
        %739 = vmatpush1.bf16.msra.mxu0 0
        %740 = vmatprep.mubr.bf16.mxu0 0
        %741 = vmatmul.mubr.bf16.gmra.mrb[0].mxu0 %v706
        %v742 = vpop.f32.mrb[0].mxu0
        %v743 = vadd.f32 0.0, %v742
        %v744 = vpop.f32.mrb[0].mxu0
        %v745 = vpop.f32.mrb[0].mxu0
        %v746 = vadd.f32 0.0, %v745
        %v747 = vpop.f32.mrb[0].mxu0
        %748 = vdwg.mxu0
        %v749 = vadd.f32 %v654, %v743
        %v750 = vadd.f32 %v655, %v746
        %v751 = vld [vmem:[#allocation8] sm:$0x1]
        %v753 = vlaneseq
        %v754 = vshrl.u32 %v753, 7
        %v755 = vsub.s32 0, %v754
        %v756 = vrot.slane %v751, %v755
        %v758 = vadd.f32 %v749, %v756
        %v759 = vadd.f32 %v750, %v756
        %v760 = vmax.f32 %v758, 0.0
        %v761 = vmax.f32 %v759, 0.0
        %762 = vst [vmem:[#allocation2] sm:$0xff] %v760
        %763 = vst [vmem:[#allocation2 + $0x8] sm:$0xff] %v761
        %v764 = vld [vmem:[#allocation2] ss:$2 sm:$0xff]
        %s765 = scalar_lea.vmem [#allocation2], 1
        %v766 = vld [vmem:[%s765] ss:$2 sm:$0xff]
        %v767 = vadd.f32 %v764, %v766
        %v768 = vld [vmem:[#allocation9] sm:$0xff]
        %v769 = vld [vmem:[#allocation9 + $0x8] sm:$0xff]
        %v770 = vld [vmem:[#allocation9 + $0x10] sm:$0xff]
        %v771 = vld [vmem:[#allocation9 + $0x18] sm:$0xff]
        %v772 = vld [vmem:[#allocation9 + $0x20] sm:$0xff]
        %v773 = vld [vmem:[#allocation9 + $0x28] sm:$0xff]
        %v774 = vld [vmem:[#allocation9 + $0x30] sm:$0xff]
        %v775 = vld [vmem:[#allocation9 + $0x38] sm:$0xff]
        %v776 = vld [vmem:[#allocation9 + $0x40] sm:$0xff]
        %v777 = vld [vmem:[#allocation9 + $0x48] sm:$0xff]
        %v778 = vld [vmem:[#allocation9 + $0x50] sm:$0xff]
        %v779 = vld [vmem:[#allocation9 + $0x58] sm:$0xff]
        %v780 = vld [vmem:[#allocation9 + $0x60] sm:$0xff]
        %v781 = vld [vmem:[#allocation9 + $0x68] sm:$0xff]
        %v782 = vld [vmem:[#allocation9 + $0x70] sm:$0xff]
        %v783 = vld [vmem:[#allocation9 + $0x78] sm:$0xff]
        %784 = vmatprep.subr.mxu0 0.0
        %785 = vmatpush1.msra.mxu0 %v768
        %786 = vmatprep.subr.mxu0 0.0
        %787 = vmatpush1.msra.mxu0 %v769
        %788 = vmatprep.subr.mxu0 0.0
        %789 = vmatpush1.msra.mxu0 %v770
        %790 = vmatprep.subr.mxu0 0.0
        %791 = vmatpush1.msra.mxu0 %v771
        %792 = vmatprep.subr.mxu0 0.0
        %793 = vmatpush1.msra.mxu0 %v772
        %794 = vmatprep.subr.mxu0 0.0
        %795 = vmatpush1.msra.mxu0 %v773
        %796 = vmatprep.subr.mxu0 0.0
        %797 = vmatpush1.msra.mxu0 %v774
        %798 = vmatprep.subr.mxu0 0.0
        %799 = vmatpush1.msra.mxu0 %v775
        %800 = vmatprep.subr.mxu0 0.0
        %801 = vmatpush1.msra.mxu0 %v776
        %802 = vmatprep.subr.mxu0 0.0
        %803 = vmatpush1.msra.mxu0 %v777
        %804 = vmatprep.subr.mxu0 0.0
        %805 = vmatpush1.msra.mxu0 %v778
        %806 = vmatprep.subr.mxu0 0.0
        %807 = vmatpush1.msra.mxu0 %v779
        %808 = vmatprep.subr.mxu0 0.0
        %809 = vmatpush1.msra.mxu0 %v780
        %810 = vmatprep.subr.mxu0 0.0
        %811 = vmatpush1.msra.mxu0 %v781
        %812 = vmatprep.subr.mxu0 0.0
        %813 = vmatpush1.msra.mxu0 %v782
        %814 = vmatprep.subr.mxu0 0.0
        %815 = vmatpush1.msra.mxu0 %v783
        %816 = vmatprep.subr.mxu0 0.0
        %817 = vmatpush1.msra.mxu0 0.0
        %818 = vmatprep.subr.mxu0 0.0
        %819 = vmatpush1.msra.mxu0 0.0
        %820 = vmatprep.subr.mxu0 0.0
        %821 = vmatpush1.msra.mxu0 0.0
        %822 = vmatprep.subr.mxu0 0.0
        %823 = vmatpush1.msra.mxu0 0.0
        %824 = vmatprep.subr.mxu0 0.0
        %825 = vmatpush1.msra.mxu0 0.0
        %826 = vmatprep.subr.mxu0 0.0
        %827 = vmatpush1.msra.mxu0 0.0
        %828 = vmatprep.subr.mxu0 0.0
        %829 = vmatpush1.msra.mxu0 0.0
        %830 = vmatprep.subr.mxu0 0.0
        %831 = vmatpush1.msra.mxu0 0.0
        %832 = vmatprep.subr.mxu0 0.0
        %833 = vmatpush1.msra.mxu0 0.0
        %834 = vmatprep.subr.mxu0 0.0
        %835 = vmatpush1.msra.mxu0 0.0
        %836 = vmatprep.subr.mxu0 0.0
        %837 = vmatpush1.msra.mxu0 0.0
        %838 = vmatprep.subr.mxu0 0.0
        %839 = vmatpush1.msra.mxu0 0.0
        %840 = vmatprep.subr.mxu0 0.0
        %841 = vmatpush1.msra.mxu0 0.0
        %842 = vmatprep.subr.mxu0 0.0
        %843 = vmatpush1.msra.mxu0 0.0
        %844 = vmatprep.subr.mxu0 0.0
        %845 = vmatpush1.msra.mxu0 0.0
        %846 = vmatprep.subr.mxu0 0.0
        %847 = vmatpush1.msra.mxu0 0.0
        %848 = vmatprep.mubr.f32.mxu0 0.0
        %849 = vmatmul.mubr.f32.gmra.mrb[0].mxu0 %v767
        %v850 = vpop.f32.mrb[0].mxu0
        %v851 = vadd.f32 0.0, %v850
        %v852 = vpop.f32.mrb[0].mxu0
        %853 = vdwg.mxu0
        %854 = vst [vmem:[%s257] sm:$0xff] %v851
        %s855 = sand.u32 %s120, 1
        %s856 = scalar_lea.sflag [#allocation5], %s855
        %s857 = sand.u32 %s120, 1
        %s858 = smul.addr %s857, 8
        %s859 = scalar_lea.vmem [#allocation11], %s858
        // Predicated region
        $region53: #{conv_block5x5_forward.1} parent=35 // pred_check
          %p860 = pneg %p130
        $region54: #{conv_block5x5_forward.1} parent=35 // pred_check_branch
          %862 = sbr.rel (%p860) target = $region56
        $region55: #{conv_block5x5_forward.1} parent=35 // pred_region
          %s864 = ssub.s32 128, 128
          %865 = vsyncadd %s856, %s864
          %s866 = smul.addr %s23, 128
          %s867 = scalar_lea.hbm %s4, %s866
          %s869 = sshll.u32 %s859, 4
          %s870 = int_to_ptr.vmem [resolvable:$true] %s869
          %872 = dma.vmem_to_hbm [thread:$0]  %s870, 128, %s867, %s856
        $region56: #{conv_block5x5_forward.1} parent=35 // pred_fallthru
          _
      $region36: #{conv_block5x5_forward.1} parent=5 // pred_fallthru
        _
      %p873 = scmp.le.s32.totalorder 2, %s18
      // Predicated region
      $region57: #{conv_block5x5_forward.1} parent=5 // pred_check
        %p874 = pneg %p873
      $region58: #{conv_block5x5_forward.1} parent=5 // pred_check_branch
        %876 = sbr.rel (%p874) target = $region60
      $region59: #{conv_block5x5_forward.1} parent=5 // pred_region
        %s877 = ssub.s32 %s18, 2
        // Predicated region
        $region61: #{conv_block5x5_forward.1} parent=59 // pred_check
          %p878 = pneg %p136
        $region62: #{conv_block5x5_forward.1} parent=59 // pred_check_branch
          %880 = sbr.rel (%p878) target = $region64
        $region63: #{conv_block5x5_forward.1} parent=59 // pred_region
          %s881 = sand.u32 %s121, 1
          %s882 = scalar_lea.sflag [#allocation5], %s881
          %s883 = sand.u32 %s121, 1
          %s884 = smul.addr %s883, 8
          %s885 = scalar_lea.vmem [#allocation11], %s884
          %886 = dma.done %s882, 128
        $region64: #{conv_block5x5_forward.1} parent=59 // pred_fallthru
          _
      $region60: #{conv_block5x5_forward.1} parent=5 // pred_fallthru
        _
    $region6: #{conv_block5x5_forward.1} parent=1 // loop_footer
      %s22 = sadd.s32 1, %s18
    $region7: #{conv_block5x5_forward.1} parent=1 // loop_footer_branch
      %17 = sbr.rel target = $region3
    $region8: #{conv_block5x5_forward.1} parent=1 // loop_exit
      _
    %887 = vsyncpa [#allocation4], 1
    %s888 = scalar_lea.sflag [#allocation4], 1
    %889 = vsyncpa %s888, 1
    %890 = vsyncpa [#allocation7], 1
    %891 = vsyncpa [#allocation10], 1
    %892 = vsyncpa [#allocation5], 1
    %s893 = scalar_lea.sflag [#allocation5], 1
    %894 = vsyncpa %s893, 1

</llo_original>
